<compile_context>
chip_gen: v7x
topology: tpu7x:2x2x1
jax: 0.10.0
libtpu: 0.0.40
codegen_flags: <defaults>
</compile_context>

<pallas_src>
import functools

import jax
import jax.numpy as jnp
from jax.experimental import pallas as pl
from jax.experimental.pallas import tpu as pltpu


def _lambda_shortcut_kernel(x_ref, sel_ref, o_ref, *, nb, c_in, pad):
    """x_ref:   (nb, c_in, h*w)        lane-dense spatially-flattened input
       sel_ref: (h*w, ho*wo)           one-hot ::2,::2 selection matrix
       o_ref:   (nb, c_in + 2*pad, ho*wo)"""
    hw = x_ref.shape[-1]
    howo = o_ref.shape[-1]
    dt = o_ref.dtype

    # One block-wide selection matmul (no per-image unroll).  The reshape is a
    # free sublane re-grouping when c_in % 8 == 0 (true for real CIFAR layers).
    x = x_ref[...].reshape(nb * c_in, hw)
    y = jnp.dot(x, sel_ref[...], preferred_element_type=jnp.float32)
    y = y.astype(dt).reshape(nb, c_in, howo)

    if pad > 0:
        z = jnp.zeros((nb, pad, howo), dt)
        o_ref[:, :pad, :] = z                 # low channel pad band
        o_ref[:, pad + c_in:, :] = z          # high channel pad band
        o_ref[:, pad:pad + c_in, :] = y       # payload, written exactly once
    else:
        o_ref[...] = y


def _round_up(a, b):
    return -(-a // b) * b


def _pick_images_per_block(n, per_img_bytes, resident_bytes,
                           budget_bytes=10 << 20, max_imgs=32):
    """Largest divisor of n such that double-buffered in+out blocks plus the
    resident sel matrix stay under `budget_bytes` (fits v5e's 16 MiB scoped
    VMEM default with headroom, well inside v7x's 64 MiB physical VMEM) and
    >= 2 grid steps remain when n >= 2 (v7x megacore sharding)."""
    avail = max(budget_bytes - resident_bytes, 2 * per_img_bytes)
    cap = max(1, min(max_imgs, avail // max(2 * per_img_bytes, 1)))
    if n >= 2:
        cap = min(cap, n // 2)
    cap = max(int(cap), 1)
    nb = 1
    for d in range(1, n + 1):
        if d <= cap and n % d == 0:
            nb = d
    return nb


def lambda_layer(x_nchw, planes):
    """NCHW equivalent of
    LambdaLayer(lambda x: F.pad(x[:, :, ::2, ::2],
                                (0,0,0,0, planes//4, planes//4), 'constant', 0))."""
    n, c, h, w = x_nchw.shape
    pad = planes // 4
    c_out = c + 2 * pad
    ho = (h + 1) // 2                 # ceil: matches x[..., ::2, ::2]
    wo = (w + 1) // 2

    # Make H, W even so the flattened view puts any padded row/col at an odd
    # index (never selected).  No-op for CIFAR shapes.
    if (h % 2) or (w % 2):
        x_nchw = jnp.pad(x_nchw, ((0, 0), (0, 0), (0, h % 2), (0, w % 2)))
    h_even, w_even = 2 * ho, 2 * wo
    hw, howo = h_even * w_even, ho * wo

    dt = x_nchw.dtype
    itemsize = jnp.dtype(dt).itemsize

    # Free, contiguous lane-dense view -- no transpose, no data movement.
    x_flat = x_nchw.reshape(n, c, hw)

    # One-hot selection: output lane r*wo + q  <-  input lane 2r*w_even + 2q.
    # Built once here (one 0/1 matrix, resident in VMEM across grid steps).
    kk = jax.lax.broadcasted_iota(jnp.int32, (hw, howo), 0)
    jj = jax.lax.broadcasted_iota(jnp.int32, (hw, howo), 1)
    sel = (kk == 2 * (jj // wo) * w_even + 2 * (jj % wo)).astype(dt)
    # TODO(synk): exact only for dtypes whose values are representable in f32
    # (all float activations; guard if reused for wide integer tensors).

    # VMEM budgeting with true lane/sublane-padded sizes.
    per_img = (_round_up(c, 8) * _round_up(hw, 128)
               + _round_up(c_out, 8) * _round_up(howo, 128)) * itemsize
    sel_bytes = 2 * _round_up(hw, 8) * _round_up(howo, 128) * itemsize
    nb = _pick_images_per_block(n, per_img, sel_bytes)
    grid = (n // nb,)

    kernel = functools.partial(_lambda_shortcut_kernel, nb=nb, c_in=c, pad=pad)

    cost = pl.CostEstimate(
        flops=2 * n * c * hw * howo,                       # selection matmul
        transcendentals=0,
        bytes_accessed=(n * c * hw + hw * howo + n * c_out * howo) * itemsize)

    out_flat = pl.pallas_call(
        kernel,
        out_shape=jax.ShapeDtypeStruct((n, c_out, howo), dt),
        grid=grid,
        in_specs=[
            pl.BlockSpec((nb, c, hw), lambda i: (i, 0, 0)),
            pl.BlockSpec((hw, howo), lambda i: (0, 0)),    # resident sel
        ],
        out_specs=pl.BlockSpec((nb, c_out, howo), lambda i: (i, 0, 0)),
        compiler_params=pltpu.CompilerParams(dimension_semantics=("parallel",)),
        cost_estimate=cost,
    )(x_flat, sel)

    # Free reshape back to NCHW.
    return out_flat.reshape(n, c_out, ho, wo)


if __name__ == "__main__":
    key = jax.random.PRNGKey(0)
    # CIFAR ResNet option-A shortcut shapes (scaled down): N=4, C=4, 16x16
    # spatial, planes = 2*C = 8 -> pad = 2 per side, C_out = 8, spatial 8x8.
    # N=4 exercises multi-image blocks: nb=2, grid=(2,) parallel steps.
    x = jax.random.normal(key, (4, 4, 16, 16), dtype=jnp.float32)
    planes = 8

    out = jax.block_until_ready(lambda_layer(x, planes))

    # pure-JAX reference of the PyTorch lambda (NCHW)
    pad = planes // 4
    ref = jnp.pad(x[:, :, ::2, ::2], ((0, 0), (pad, pad), (0, 0), (0, 0)))

    assert out.shape == ref.shape, (out.shape, ref.shape)
    assert out.dtype == ref.dtype
    assert jnp.allclose(out, ref), "mismatch vs reference"
    print("KERNEL_OK")
</pallas_src>

<mosaic_0001>
module attributes {stable_mosaic.version = 11 : i64} {
  func.func @_lambda_shortcut_kernel(%arg0: i32, %arg1: memref<2x4x256xf32, #tpu.memory_space<vmem>>, %arg2: memref<256x64xf32, #tpu.memory_space<vmem>>, %arg3: memref<2x8x64xf32, #tpu.memory_space<vmem>>) attributes {dimension_semantics = [#tpu.dimension_semantics<parallel>], iteration_bounds = array<i64: 2>, scalar_prefetch = 0 : i64, scratch_operands = 0 : i64, tpu.core_type = #tpu.core_type<tc>, window_params = [{transform_indices = @transform_0, window_bounds = array<i64: 2, 4, 256>}, {pipeline_mode = #tpu.pipeline_mode<synchronous>, transform_indices = @transform_1, window_bounds = array<i64: 256, 64>}, {transform_indices = @transform_2, window_bounds = array<i64: 2, 8, 64>}]} {
    %c0 = arith.constant 0 : index
    %c0_0 = arith.constant 0 : index
    %c0_1 = arith.constant 0 : index
    %0 = vector.load %arg1[%c0, %c0_0, %c0_1] : memref<2x4x256xf32, #tpu.memory_space<vmem>>, vector<2x4x256xf32>
    %1 = vector.shape_cast %0 : vector<2x4x256xf32> to vector<8x256xf32>
    %c0_2 = arith.constant 0 : index
    %c0_3 = arith.constant 0 : index
    %2 = vector.load %arg2[%c0_2, %c0_3] : memref<256x64xf32, #tpu.memory_space<vmem>>, vector<256x64xf32>
    %cst = arith.constant dense<0.000000e+00> : vector<8x64xf32>
    %3 = tpu.matmul %1, %2, %cst {dimension_numbers = #tpu.dot_dimension_numbers<[1], [0], [0], [1], [0, 0, 1, 1], [], []>} : vector<8x256xf32>, vector<256x64xf32>, vector<8x64xf32> -> vector<8x64xf32>
    %4 = vector.shape_cast %3 : vector<8x64xf32> to vector<2x4x64xf32>
    %cst_4 = arith.constant 0.000000e+00 : f32
    %5 = vector.broadcast %cst_4 : f32 to vector<2x2x64xf32>
    %c0_5 = arith.constant 0 : index
    %c0_6 = arith.constant 0 : index
    %c0_7 = arith.constant 0 : index
    %6 = vector.load %arg3[%c0_5, %c0_6, %c0_7] : memref<2x8x64xf32, #tpu.memory_space<vmem>>, vector<2x2x64xf32>
    tpu.vector_store %arg3[%c0_5, %c0_6, %c0_7], %5 {strides = array<i32>} : memref<2x8x64xf32, #tpu.memory_space<vmem>>, vector<2x2x64xf32>,
    %c0_8 = arith.constant 0 : index
    %c6 = arith.constant 6 : index
    %c0_9 = arith.constant 0 : index
    %7 = vector.load %arg3[%c0_8, %c6, %c0_9] : memref<2x8x64xf32, #tpu.memory_space<vmem>>, vector<2x2x64xf32>
    tpu.vector_store %arg3[%c0_8, %c6, %c0_9], %5 {strides = array<i32>} : memref<2x8x64xf32, #tpu.memory_space<vmem>>, vector<2x2x64xf32>,
    %c0_10 = arith.constant 0 : index
    %c2 = arith.constant 2 : index
    %c0_11 = arith.constant 0 : index
    %8 = vector.load %arg3[%c0_10, %c2, %c0_11] : memref<2x8x64xf32, #tpu.memory_space<vmem>>, vector<2x4x64xf32>
    tpu.vector_store %arg3[%c0_10, %c2, %c0_11], %4 {strides = array<i32>} : memref<2x8x64xf32, #tpu.memory_space<vmem>>, vector<2x4x64xf32>,
    return
  }
  func.func @transform_0(%arg0: i32) -> (i32, i32, i32) {
    %c0_i32 = arith.constant 0 : i32
    %c0_i32_0 = arith.constant 0 : i32
    %c0_i32_1 = arith.constant 0 : i32
    return %arg0, %c0_i32, %c0_i32_0 : i32, i32, i32
  }
  func.func @transform_1(%arg0: i32) -> (i32, i32) {
    %c0_i32 = arith.constant 0 : i32
    %c0_i32_0 = arith.constant 0 : i32
    %c0_i32_1 = arith.constant 0 : i32
    return %c0_i32, %c0_i32_0 : i32, i32
  }
  func.func @transform_2(%arg0: i32) -> (i32, i32, i32) {
    %c0_i32 = arith.constant 0 : i32
    %c0_i32_0 = arith.constant 0 : i32
    %c0_i32_1 = arith.constant 0 : i32
    return %arg0, %c0_i32, %c0_i32_0 : i32, i32, i32
  }
}

</mosaic_0001>

<llo_original>
// kernel: tpu_custom_call.1
$region0: #{tpu_custom_call.1}
  #allocation0 [shape = 'u32[]', space=smem, size = 0x4, offset = 0x4, fixed_abs, tag = 'smem constant byte address 0x4 - core index']
  #allocation1 [shape = 'u32[144,128]{1,0:T(1,128)}', space=vmem, size = 0x12000, scoped, tag = 'internal scratch']
  %s0 = inlined_call_operand.vmem [shape: f32[4,4,256], index: 0, kind: input, shape index: {}]
  %s1 = inlined_call_operand.vmem [shape: f32[256,64], index: 1, kind: input, shape index: {}]
  %s2 = inlined_call_operand.hbm [shape: f32[4,8,64], index: 2, kind: output, shape index: {}]
  %s3 = sld [smem:[#allocation0]]
  $region41: #{tpu_custom_call.1} parent=0
    _
  %s5 = ssub.s32 1, %s3
  %s6 = scalar_select 0, %s5, %s3
  $region1: #{tpu_custom_call.1} parent=0
    #allocation2 [shape = 'u8[16384]{0}', space=vmem, size = 0x4000, scoped, tag = 'output window, operand 0']
    #allocation3 [shape = 's32[2]{0}', space=sflag, size = 0x8, scoped, tag = 'scoped memory for tpu_custom_call.1']
    %7 = vsyncpa [#allocation3], 0
    %s8 = scalar_lea.sflag [#allocation3], 1
    %9 = vsyncpa %s8, 0
    loop: start=0, step=1, limit=4
    $region2: #{tpu_custom_call.1} parent=1 // loop_pre_header
      _
    $region3: #{tpu_custom_call.1} parent=1 // loop_header
      %s11 = sphi 0, %s15
      %p12 = scmp.ge.s32.totalorder %s11, 4
      %s21 = sphi 0, %s23
      %s24 = sphi 0, %s21
      %s25 = sphi 0, %s24
      %s41 = sphi 0, %s25
      %s45 = sphi 0, %s45
      %s47 = sphi 0, %s45
      %s48 = sphi 0, %s47
      %s62 = sphi 0, %s48
      %s68 = sphi 0, %s70
      %s71 = sphi 0, %s68
      %s72 = sphi 0, %s71
      %s88 = sphi 0, %s72
    $region4: #{tpu_custom_call.1} parent=1 // loop_header_branch
      %14 = sbr.rel (%p12) target = $region8
    $region5: #{tpu_custom_call.1} parent=1 // loop_body
      %s16 = ssub.s32 %s11, 1
      %s17 = ssub.s32 %s11, 2
      %s18 = sadd.s32 %s11, 1
      %s19 = ssub.s32 %s11, %s18
      %p20 = scmp.eq.s32.totalorder %s19, 0
      %s22 = sadd.s32 %s21, 1
      %s23 = scalar_select %p20, %s21, %s22
      %p26 = pneg %p20
      %p27 = scmp.eq.s32.totalorder %s11, 1
      %p28 = por %p26, %p27
      %p29 = scmp.ne.s32.totalorder %s21, %s24
      %p30 = scmp.eq.s32.totalorder %s11, 0
      %p31 = por %p29, %p30
      %p32 = scmp.ne.s32.totalorder %s21, %s24
      %p33 = scmp.eq.s32.totalorder %s16, 1
      %p34 = por %p32, %p33
      %p35 = scmp.ne.s32.totalorder %s24, %s25
      %p36 = scmp.eq.s32.totalorder %s16, 0
      %p37 = por %p35, %p36
      %p38 = scmp.ne.s32.totalorder %s24, %s25
      %p39 = scmp.eq.s32.totalorder %s17, 1
      %p40 = por %p38, %p39
      %p42 = scmp.ne.s32.totalorder %s25, %s41
      %p43 = scmp.eq.s32.totalorder %s17, 0
      %p44 = por %p42, %p43
      %s46 = sadd.s32 %s45, 1
      %p49 = scmp.eq.s32.totalorder %s11, 1
      %p50 = scmp.ne.s32.totalorder %s45, %s47
      %p51 = scmp.eq.s32.totalorder %s11, 0
      %p52 = por %p50, %p51
      %p53 = scmp.ne.s32.totalorder %s45, %s47
      %p54 = scmp.eq.s32.totalorder %s16, 1
      %p55 = por %p53, %p54
      %p56 = scmp.ne.s32.totalorder %s47, %s48
      %p57 = scmp.eq.s32.totalorder %s16, 0
      %p58 = por %p56, %p57
      %p59 = scmp.ne.s32.totalorder %s47, %s48
      %p60 = scmp.eq.s32.totalorder %s17, 1
      %p61 = por %p59, %p60
      %p63 = scmp.ne.s32.totalorder %s48, %s62
      %p64 = scmp.eq.s32.totalorder %s17, 0
      %p65 = por %p63, %p64
      %s66 = ssub.s32 %s11, %s18
      %p67 = scmp.eq.s32.totalorder %s66, 0
      %s69 = sadd.s32 %s68, 1
      %s70 = scalar_select %p67, %s68, %s69
      %p73 = pneg %p67
      %p74 = scmp.eq.s32.totalorder %s11, 1
      %p75 = por %p73, %p74
      %p76 = scmp.ne.s32.totalorder %s68, %s71
      %p77 = scmp.eq.s32.totalorder %s11, 0
      %p78 = por %p76, %p77
      %p79 = scmp.ne.s32.totalorder %s68, %s71
      %p80 = scmp.eq.s32.totalorder %s16, 1
      %p81 = por %p79, %p80
      %p82 = scmp.ne.s32.totalorder %s71, %s72
      %p83 = scmp.eq.s32.totalorder %s16, 0
      %p84 = por %p82, %p83
      %p85 = scmp.ne.s32.totalorder %s71, %s72
      %p86 = scmp.eq.s32.totalorder %s17, 1
      %p87 = por %p85, %p86
      %p89 = scmp.ne.s32.totalorder %s72, %s88
      %p90 = scmp.eq.s32.totalorder %s17, 0
      %p91 = por %p89, %p90
      %p92 = scmp.le.s32.totalorder 1, %s11
      %p93 = scmp.lt.s32.totalorder %s11, 3
      %p94 = pnand %p92, %p93
      %p95 = pneg %p94
      // Predicated region
      $region9: #{tpu_custom_call.1} parent=5 // pred_check
        _
      $region10: #{tpu_custom_call.1} parent=5 // pred_check_branch
        %97 = sbr.rel (%p94) target = $region12
      $region11: #{tpu_custom_call.1} parent=5 // pred_region
        %s98 = ssub.s32 %s11, 1
        // Predicated region
        $region13: #{tpu_custom_call.1} parent=11 // pred_check
          %p99 = pneg %p58
        $region14: #{tpu_custom_call.1} parent=11 // pred_check_branch
          %101 = sbr.rel (%p99) target = $region16
        $region15: #{tpu_custom_call.1} parent=11 // pred_region
          _
        $region16: #{tpu_custom_call.1} parent=11 // pred_fallthru
          _
      $region12: #{tpu_custom_call.1} parent=5 // pred_fallthru
        _
      %p102 = scmp.lt.s32.totalorder %s11, 2
      // Predicated region
      $region17: #{tpu_custom_call.1} parent=5 // pred_check
        %p103 = pneg %p102
      $region18: #{tpu_custom_call.1} parent=5 // pred_check_branch
        %105 = sbr.rel (%p103) target = $region20
      $region19: #{tpu_custom_call.1} parent=5 // pred_region
        // Predicated region
        $region21: #{tpu_custom_call.1} parent=19 // pred_check
          %p106 = pneg %p31
        $region22: #{tpu_custom_call.1} parent=19 // pred_check_branch
          %108 = sbr.rel (%p106) target = $region24
        $region23: #{tpu_custom_call.1} parent=19 // pred_region
          %s109 = smul.u32 2, %s11
          %p110 = scmp.lt.s32.totalorder %s109, 3
          %s111 = scalar_select %p110, %s109, 3
          %s112 = smul.addr %s111, 2
          %s113 = smul.addr %s112, 4
          %s114 = scalar_lea.vmem %s0, %s113
          %s115 = smul.u32 2, %s11
        $region24: #{tpu_custom_call.1} parent=19 // pred_fallthru
          _
      $region20: #{tpu_custom_call.1} parent=5 // pred_fallthru
        _
      %p116 = scmp.le.s32.totalorder 1, %s11
      %p117 = scmp.lt.s32.totalorder %s11, 3
      %p118 = pnand %p116, %p117
      %p119 = pneg %p118
      // Predicated region
      $region25: #{tpu_custom_call.1} parent=5 // pred_check
        _
      $region26: #{tpu_custom_call.1} parent=5 // pred_check_branch
        %121 = sbr.rel (%p118) target = $region28
      $region27: #{tpu_custom_call.1} parent=5 // pred_region
        %s122 = ssub.s32 %s11, 1
        %s123 = smul.u32 2, %s16
        %p124 = scmp.lt.s32.totalorder %s123, 3
        %s125 = scalar_select %p124, %s123, 3
        %s126 = smul.addr %s125, 2
        %s127 = smul.addr %s126, 4
        %s128 = scalar_lea.vmem %s0, %s127
        %p129 = pneg %p37
        %p130 = pneg %p34
        %p131 = pneg %p58
        %p132 = pneg %p55
        %p133 = pneg %p84
        %p134 = pneg %p81
        %s135 = sand.u32 %s71, 1
        %s136 = scalar_lea.sflag [#allocation3], %s135
        %s137 = sand.u32 %s71, 1
        %s138 = smul.addr %s137, 16
        %s139 = scalar_lea.vmem [#allocation2], %s138
        %s140 = smul.u32 2, %s16
        %p141 = scmp.lt.s32.totalorder %s140, 3
        %s142 = scalar_select %p141, %s140, 3
        %s143 = smul.addr %s142, 2
        %s144 = smul.addr %s143, 4
        %s145 = scalar_lea.vmem %s0, %s144
        %s146 = smul.u32 2, %s16
        %s147 = smul.u32 2, %s16
        %v148 = vld [vmem:[%s145] sm:$0xff]
        %v149 = vld [vmem:[%s145 + $0x8] sm:$0xff]
        %v150 = vld [vmem:[%s1] sm:$0xff]
        %v151 = vld [vmem:[%s1 + $0x8] sm:$0xff]
        %v152 = vld [vmem:[%s1 + $0x10] sm:$0xff]
        %v153 = vld [vmem:[%s1 + $0x18] sm:$0xff]
        %v154 = vld [vmem:[%s1 + $0x20] sm:$0xff]
        %v155 = vld [vmem:[%s1 + $0x28] sm:$0xff]
        %v156 = vld [vmem:[%s1 + $0x30] sm:$0xff]
        %v157 = vld [vmem:[%s1 + $0x38] sm:$0xff]
        %v158 = vld [vmem:[%s1 + $0x40] sm:$0xff]
        %v159 = vld [vmem:[%s1 + $0x48] sm:$0xff]
        %v160 = vld [vmem:[%s1 + $0x50] sm:$0xff]
        %v161 = vld [vmem:[%s1 + $0x58] sm:$0xff]
        %v162 = vld [vmem:[%s1 + $0x60] sm:$0xff]
        %v163 = vld [vmem:[%s1 + $0x68] sm:$0xff]
        %v164 = vld [vmem:[%s1 + $0x70] sm:$0xff]
        %v165 = vld [vmem:[%s1 + $0x78] sm:$0xff]
        %v166 = vld [vmem:[%s1 + $0x80] sm:$0xff]
        %v167 = vld [vmem:[%s1 + $0x88] sm:$0xff]
        %v168 = vld [vmem:[%s1 + $0x90] sm:$0xff]
        %v169 = vld [vmem:[%s1 + $0x98] sm:$0xff]
        %v170 = vld [vmem:[%s1 + $0xa0] sm:$0xff]
        %v171 = vld [vmem:[%s1 + $0xa8] sm:$0xff]
        %v172 = vld [vmem:[%s1 + $0xb0] sm:$0xff]
        %v173 = vld [vmem:[%s1 + $0xb8] sm:$0xff]
        %v174 = vld [vmem:[%s1 + $0xc0] sm:$0xff]
        %v175 = vld [vmem:[%s1 + $0xc8] sm:$0xff]
        %v176 = vld [vmem:[%s1 + $0xd0] sm:$0xff]
        %v177 = vld [vmem:[%s1 + $0xd8] sm:$0xff]
        %v178 = vld [vmem:[%s1 + $0xe0] sm:$0xff]
        %v179 = vld [vmem:[%s1 + $0xe8] sm:$0xff]
        %v180 = vld [vmem:[%s1 + $0xf0] sm:$0xff]
        %v181 = vld [vmem:[%s1 + $0xf8] sm:$0xff]
        %v184 = vcombine.low %v148, %v149
        %v185 = vcombine.high %v148, %v149
        %188 = vmatprep.subr.mxu0 0.0
        %189 = vmatpush1.msra.mxu0 %v150
        %190 = vmatprep.subr.mxu0 0.0
        %191 = vmatpush1.msra.mxu0 %v151
        %192 = vmatprep.subr.mxu0 0.0
        %193 = vmatpush1.msra.mxu0 %v152
        %194 = vmatprep.subr.mxu0 0.0
        %195 = vmatpush1.msra.mxu0 %v153
        %196 = vmatprep.subr.mxu0 0.0
        %197 = vmatpush1.msra.mxu0 %v154
        %198 = vmatprep.subr.mxu0 0.0
        %199 = vmatpush1.msra.mxu0 %v155
        %200 = vmatprep.subr.mxu0 0.0
        %201 = vmatpush1.msra.mxu0 %v156
        %202 = vmatprep.subr.mxu0 0.0
        %203 = vmatpush1.msra.mxu0 %v157
        %204 = vmatprep.subr.mxu0 0.0
        %205 = vmatpush1.msra.mxu0 %v158
        %206 = vmatprep.subr.mxu0 0.0
        %207 = vmatpush1.msra.mxu0 %v159
        %208 = vmatprep.subr.mxu0 0.0
        %209 = vmatpush1.msra.mxu0 %v160
        %210 = vmatprep.subr.mxu0 0.0
        %211 = vmatpush1.msra.mxu0 %v161
        %212 = vmatprep.subr.mxu0 0.0
        %213 = vmatpush1.msra.mxu0 %v162
        %214 = vmatprep.subr.mxu0 0.0
        %215 = vmatpush1.msra.mxu0 %v163
        %216 = vmatprep.subr.mxu0 0.0
        %217 = vmatpush1.msra.mxu0 %v164
        %218 = vmatprep.subr.mxu0 0.0
        %219 = vmatpush1.msra.mxu0 %v165
        %220 = vmatprep.subr.mxu0 0.0
        %221 = vmatpush1.msra.mxu0 %v166
        %222 = vmatprep.subr.mxu0 0.0
        %223 = vmatpush1.msra.mxu0 %v167
        %224 = vmatprep.subr.mxu0 0.0
        %225 = vmatpush1.msra.mxu0 %v168
        %226 = vmatprep.subr.mxu0 0.0
        %227 = vmatpush1.msra.mxu0 %v169
        %228 = vmatprep.subr.mxu0 0.0
        %229 = vmatpush1.msra.mxu0 %v170
        %230 = vmatprep.subr.mxu0 0.0
        %231 = vmatpush1.msra.mxu0 %v171
        %232 = vmatprep.subr.mxu0 0.0
        %233 = vmatpush1.msra.mxu0 %v172
        %234 = vmatprep.subr.mxu0 0.0
        %235 = vmatpush1.msra.mxu0 %v173
        %236 = vmatprep.subr.mxu0 0.0
        %237 = vmatpush1.msra.mxu0 %v174
        %238 = vmatprep.subr.mxu0 0.0
        %239 = vmatpush1.msra.mxu0 %v175
        %240 = vmatprep.subr.mxu0 0.0
        %241 = vmatpush1.msra.mxu0 %v176
        %242 = vmatprep.subr.mxu0 0.0
        %243 = vmatpush1.msra.mxu0 %v177
        %244 = vmatprep.subr.mxu0 0.0
        %245 = vmatpush1.msra.mxu0 %v178
        %246 = vmatprep.subr.mxu0 0.0
        %247 = vmatpush1.msra.mxu0 %v179
        %248 = vmatprep.subr.mxu0 0.0
        %249 = vmatpush1.msra.mxu0 %v180
        %250 = vmatprep.subr.mxu0 0.0
        %251 = vmatpush1.msra.mxu0 %v181
        %252 = vmatprep.mubr.f32.mxu0 %v185
        %253 = vmatmul.mubr.f32.gmra.mrb[0].mxu0 %v184
        %v254 = vpop.f32.mrb[0].mxu0
        %v255 = vadd.f32 0.0, %v254
        %v256 = vpop.f32.mrb[0].mxu0
        %257 = vdwg.mxu0
        %v259 = vcombine.high %v255, %v255
        %vm261 = vcmask 517120
        %262 = vst.msk [vmem:[%s139] sm:$0x3] %vm261, 0.0
        %263 = vst.msk [vmem:[%s139 + $0x8] sm:$0x3] %vm261, 0.0
        %264 = vst.msk [vmem:[%s139 + $0x6] sm:$0x3] %vm261, 0.0
        %265 = vst.msk [vmem:[%s139 + $0xe] sm:$0x3] %vm261, 0.0
        %vm266 = vcmask 519168
        %267 = vst.msk [vmem:[%s139 + $0x2] sm:$0xf] %vm266, %v255
        %268 = vst.msk [vmem:[%s139 + $0xa] sm:$0xf] %vm266, %v259
        %s269 = sand.u32 %s71, 1
        %s270 = scalar_lea.sflag [#allocation3], %s269
        %s271 = sand.u32 %s71, 1
        %s272 = smul.addr %s271, 16
        %s273 = scalar_lea.vmem [#allocation2], %s272
        // Predicated region
        $region29: #{tpu_custom_call.1} parent=27 // pred_check
          %p274 = pneg %p81
        $region30: #{tpu_custom_call.1} parent=27 // pred_check_branch
          %276 = sbr.rel (%p274) target = $region32
        $region31: #{tpu_custom_call.1} parent=27 // pred_region
          %s277 = smul.u32 2, %s16
          %s279 = ssub.s32 256, 256
          %280 = vsyncadd %s270, %s279
          %s281 = smul.addr %s277, 128
          %s282 = scalar_lea.hbm %s2, %s281
          %s283 = sshll.u32 %s273, 4
          %s284 = int_to_ptr.vmem [resolvable:$true] %s283
          %289 = dma.vmem_to_hbm [thread:$0]  %s284, 256, %s282, %s270, 128, 128, 8
        $region32: #{tpu_custom_call.1} parent=27 // pred_fallthru
          _
      $region28: #{tpu_custom_call.1} parent=5 // pred_fallthru
        _
      %p290 = scmp.le.s32.totalorder 2, %s11
      // Predicated region
      $region33: #{tpu_custom_call.1} parent=5 // pred_check
        %p291 = pneg %p290
      $region34: #{tpu_custom_call.1} parent=5 // pred_check_branch
        %293 = sbr.rel (%p291) target = $region36
      $region35: #{tpu_custom_call.1} parent=5 // pred_region
        %s294 = ssub.s32 %s11, 2
        // Predicated region
        $region37: #{tpu_custom_call.1} parent=35 // pred_check
          %p295 = pneg %p87
        $region38: #{tpu_custom_call.1} parent=35 // pred_check_branch
          %297 = sbr.rel (%p295) target = $region40
        $region39: #{tpu_custom_call.1} parent=35 // pred_region
          %s298 = sand.u32 %s72, 1
          %s299 = scalar_lea.sflag [#allocation3], %s298
          %s300 = sand.u32 %s72, 1
          %s301 = smul.addr %s300, 16
          %s302 = scalar_lea.vmem [#allocation2], %s301
          %303 = dma.done %s299, 256
        $region40: #{tpu_custom_call.1} parent=35 // pred_fallthru
          _
      $region36: #{tpu_custom_call.1} parent=5 // pred_fallthru
        _
    $region6: #{tpu_custom_call.1} parent=1 // loop_footer
      %s15 = sadd.s32 1, %s11
    $region7: #{tpu_custom_call.1} parent=1 // loop_footer_branch
      %10 = sbr.rel target = $region3
    $region8: #{tpu_custom_call.1} parent=1 // loop_exit
      _
    %304 = vsyncpa [#allocation3], 1
    %s305 = scalar_lea.sflag [#allocation3], 1
    %306 = vsyncpa %s305, 1

</llo_original>
